<compile_context>
chip_gen: v7x
topology: tpu7x:2x2x1
jax: 0.10.0
libtpu: 0.0.40
codegen_flags: <defaults>
</compile_context>

<pallas_src>
import jax
import jax.numpy as jnp
import numpy as np
from jax.experimental import pallas as pl
from jax.experimental.pallas import tpu as pltpu

PRIMITIVE_LIST = ("acc", "pos_z", "speed", "dist_to_ball")
NUM_PRIMITIVES = len(PRIMITIVE_LIST)


def _align_differential(x):
    """AlignDifferential along axis 0: pad by linear extrapolation, central diff / 2."""
    front = 2.0 * x[0:1] - x[1:2]
    back = 2.0 * x[-1:] - x[-2:-1]
    padded = jnp.concatenate([front, x, back], axis=0)      # (L+2, A, D)
    return (padded[2:] - padded[:-2]) * 0.5                 # (L, A, D)


def _unary_primitives_kernel(states_ref, thresh_ref, inv_temp_ref, out_ref):
    # states_ref  : (1, L, A, D)        VMEM
    # thresh_ref  : (1, 1, 4*cmp_dim)   VMEM  (thresholds in concat lane order)
    # inv_temp_ref: (1,)                SMEM  (= exp(-beta))
    # out_ref     : (1, L, A-1, 4*cmp)  VMEM
    s = states_ref[0].astype(jnp.float32)        # (L, A, D)
    thr = thresh_ref[...].astype(jnp.float32)    # (1, 1, 4*cmp)
    inv_temp = inv_temp_ref[0]

    L, A, _ = s.shape
    am1 = A - 1
    cmp_dim = thr.shape[-1] // NUM_PRIMITIVES

    vel = _align_differential(s)                 # (L, A, D)
    acc = _align_differential(vel)               # (L, A, D)

    vel_a = vel[:, 1:, :]                        # (L, A-1, D)
    acc_a = acc[:, 1:, :]
    dvec = s[:, 1:, :] - s[:, 0:1, :]            # offset to the ball (agent 0)

    speed = jnp.sqrt(jnp.sum(vel_a * vel_a, axis=-1, keepdims=True))   # (L, A-1, 1)
    acc_m = jnp.sqrt(jnp.sum(acc_a * acc_a, axis=-1, keepdims=True))
    dist = jnp.sqrt(jnp.sum(dvec * dvec, axis=-1, keepdims=True))
    pos_z = s[:, 1:, 2:3]                                              # (L, A-1, 1)

    # Lay the four primitives out along the lane axis in primitive_list order,
    # then do one fused subtract/scale/sigmoid over the whole (L, A-1, 4*cmp) slab.
    feat = jnp.concatenate([
        jnp.broadcast_to(acc_m, (L, am1, cmp_dim)),
        jnp.broadcast_to(pos_z, (L, am1, cmp_dim)),
        jnp.broadcast_to(speed, (L, am1, cmp_dim)),
        jnp.broadcast_to(dist, (L, am1, cmp_dim)),
    ], axis=-1)                                                        # (L, A-1, 4*cmp)

    out = jax.nn.sigmoid((feat - thr) * inv_temp)                      # SoftCmp
    out_ref[0] = out.astype(out_ref.dtype)


def unary_primitives_predefined_v2_forward(states, thresholds, beta=0.0):
    """Pallas equivalent of UnaryPrimitivesPredefined_v2.forward.

    :param states: [batch, length, n_agents, state_dim]  (length>=2, n_agents>=2, state_dim>=3)
    :param thresholds: [4, cmp_dim] Inequality thresholds, rows in the order
                       ('acc', 'pos_z', 'speed', 'dist_to_ball')
    :param beta: SoftCmp temperature (reference divides by exp(beta))
    :return: [batch, length, n_agents - 1, 4 * cmp_dim]
    """
    B, L, A, D = states.shape
    assert L >= 2 and A >= 2 and D >= 3, (L, A, D)
    n_prims, cmp_dim = thresholds.shape
    assert n_prims == NUM_PRIMITIVES
    out_dim = n_prims * cmp_dim

    thr_flat = thresholds.astype(jnp.float32).reshape(1, 1, out_dim)
    inv_temp = jnp.exp(-jnp.asarray(beta, jnp.float32)).reshape(1)

    # TODO(synk): the 'estimate_parameters' kwarg path (data-driven threshold
    # re-estimation inside Inequality) is training-time machinery and is not
    # implemented; thresholds are taken as explicit parameters instead.
    return pl.pallas_call(
        _unary_primitives_kernel,
        out_shape=jax.ShapeDtypeStruct((B, L, A - 1, out_dim), states.dtype),
        grid=(B,),
        in_specs=[
            pl.BlockSpec((1, L, A, D), lambda b: (b, 0, 0, 0)),
            pl.BlockSpec((1, 1, out_dim), lambda b: (0, 0, 0)),
            pl.BlockSpec(memory_space=pltpu.MemorySpace.SMEM),
        ],
        out_specs=pl.BlockSpec((1, L, A - 1, out_dim), lambda b: (b, 0, 0, 0)),
        compiler_params=pltpu.CompilerParams(
            dimension_semantics=("parallel",)),
    )(states, thr_flat, inv_temp)


def _reference_forward(states, thresholds, beta=0.0):
    """Pure-JAX reference mirroring the PyTorch module (for validation)."""
    def align_diff(x):
        front = 2.0 * x[:, 0:1] - x[:, 1:2]
        back = 2.0 * x[:, -1:] - x[:, -2:-1]
        padded = jnp.concatenate([front, x, back], axis=1)
        return (padded[:, 2:] - padded[:, :-2]) * 0.5

    s = states.astype(jnp.float32)
    vel = align_diff(s)
    acc = align_diff(vel)
    feats = {
        "acc": jnp.linalg.norm(acc[:, :, 1:, :], axis=-1),
        "pos_z": s[:, :, 1:, 2],
        "speed": jnp.linalg.norm(vel[:, :, 1:, :], axis=-1),
        "dist_to_ball": jnp.linalg.norm(s[:, :, 1:, :] - s[:, :, 0:1, :], axis=-1),
    }
    inv = jnp.exp(-jnp.asarray(beta, jnp.float32))
    outs = [
        jax.nn.sigmoid((feats[k][..., None] - thresholds[i].astype(jnp.float32)) * inv)
        for i, k in enumerate(PRIMITIVE_LIST)
    ]
    return jnp.concatenate(outs, axis=-1).astype(states.dtype)


if __name__ == "__main__":
    key = jax.random.PRNGKey(0)
    k_states, k_thr = jax.random.split(key)

    batch, length, n_agents, state_dim, cmp_dim = 2, 8, 4, 3, 10
    states = jax.random.normal(
        k_states, (batch, length, n_agents, state_dim), dtype=jnp.float32)
    thresholds = jax.random.normal(
        k_thr, (NUM_PRIMITIVES, cmp_dim), dtype=jnp.float32)
    beta = 0.0

    out = unary_primitives_predefined_v2_forward(states, thresholds, beta)
    out = jax.block_until_ready(out)

    ref = jax.block_until_ready(_reference_forward(states, thresholds, beta))

    assert out.shape == (batch, length, n_agents - 1, NUM_PRIMITIVES * cmp_dim), out.shape
    assert out.dtype == states.dtype
    np.testing.assert_allclose(np.asarray(out), np.asarray(ref), rtol=1e-4, atol=1e-5)
    print("KERNEL_OK")
</pallas_src>

<mosaic_0001>
module attributes {stable_mosaic.version = 11 : i64} {
  func.func @_unary_primitives_kernel(%arg0: i32, %arg1: memref<1x8x4x3xf32, #tpu.memory_space<vmem>>, %arg2: memref<1x1x40xf32, #tpu.memory_space<vmem>>, %arg3: memref<1xf32, #tpu.memory_space<smem>>, %arg4: memref<1x8x3x40xf32, #tpu.memory_space<vmem>>) attributes {dimension_semantics = [#tpu.dimension_semantics<parallel>], iteration_bounds = array<i64: 2>, scalar_prefetch = 0 : i64, scratch_operands = 0 : i64, tpu.core_type = #tpu.core_type<tc>, window_params = [{transform_indices = @transform_0, window_bounds = array<i64: 1, 8, 4, 3>}, {pipeline_mode = #tpu.pipeline_mode<synchronous>, transform_indices = @transform_1, window_bounds = array<i64: 1, 1, 40>}, {transform_indices = @transform_2, window_bounds = array<i64: 1>}, {transform_indices = @transform_3, window_bounds = array<i64: 1, 8, 3, 40>}]} {
    %c0 = arith.constant 0 : index
    %c0_0 = arith.constant 0 : index
    %c0_1 = arith.constant 0 : index
    %c0_2 = arith.constant 0 : index
    %0 = vector.load %arg1[%c0, %c0_0, %c0_1, %c0_2] : memref<1x8x4x3xf32, #tpu.memory_space<vmem>>, vector<1x8x4x3xf32>
    %1 = vector.shape_cast %0 : vector<1x8x4x3xf32> to vector<8x4x3xf32>
    %c0_3 = arith.constant 0 : index
    %c0_4 = arith.constant 0 : index
    %c0_5 = arith.constant 0 : index
    %2 = vector.load %arg2[%c0_3, %c0_4, %c0_5] : memref<1x1x40xf32, #tpu.memory_space<vmem>>, vector<1x1x40xf32>
    %c0_6 = arith.constant 0 : index
    %3 = memref.load %arg3[%c0_6] : memref<1xf32, #tpu.memory_space<smem>>
    %4 = vector.extract_strided_slice %1 {offsets = [0, 0, 0], sizes = [1, 4, 3], strides = [1, 1, 1]} : vector<8x4x3xf32> to vector<1x4x3xf32>
    %cst = arith.constant 2.000000e+00 : f32
    %5 = vector.broadcast %cst : f32 to vector<1x4x3xf32>
    %6 = arith.mulf %5, %4 : vector<1x4x3xf32>
    %7 = vector.extract_strided_slice %1 {offsets = [1, 0, 0], sizes = [1, 4, 3], strides = [1, 1, 1]} : vector<8x4x3xf32> to vector<1x4x3xf32>
    %8 = arith.subf %6, %7 : vector<1x4x3xf32>
    %9 = vector.extract_strided_slice %1 {offsets = [7, 0, 0], sizes = [1, 4, 3], strides = [1, 1, 1]} : vector<8x4x3xf32> to vector<1x4x3xf32>
    %cst_7 = arith.constant 2.000000e+00 : f32
    %10 = vector.broadcast %cst_7 : f32 to vector<1x4x3xf32>
    %11 = arith.mulf %10, %9 : vector<1x4x3xf32>
    %12 = vector.extract_strided_slice %1 {offsets = [6, 0, 0], sizes = [1, 4, 3], strides = [1, 1, 1]} : vector<8x4x3xf32> to vector<1x4x3xf32>
    %13 = arith.subf %11, %12 : vector<1x4x3xf32>
    %14 = tpu.concatenate %8, %1, %13 in 0 : vector<1x4x3xf32>, vector<8x4x3xf32>, vector<1x4x3xf32> -> vector<10x4x3xf32>
    %15 = vector.extract_strided_slice %14 {offsets = [2, 0, 0], sizes = [8, 4, 3], strides = [1, 1, 1]} : vector<10x4x3xf32> to vector<8x4x3xf32>
    %16 = vector.extract_strided_slice %14 {offsets = [0, 0, 0], sizes = [8, 4, 3], strides = [1, 1, 1]} : vector<10x4x3xf32> to vector<8x4x3xf32>
    %17 = arith.subf %15, %16 : vector<8x4x3xf32>
    %cst_8 = arith.constant 5.000000e-01 : f32
    %18 = vector.broadcast %cst_8 : f32 to vector<8x4x3xf32>
    %19 = arith.mulf %17, %18 : vector<8x4x3xf32>
    %20 = vector.extract_strided_slice %19 {offsets = [0, 0, 0], sizes = [1, 4, 3], strides = [1, 1, 1]} : vector<8x4x3xf32> to vector<1x4x3xf32>
    %cst_9 = arith.constant 2.000000e+00 : f32
    %21 = vector.broadcast %cst_9 : f32 to vector<1x4x3xf32>
    %22 = arith.mulf %21, %20 : vector<1x4x3xf32>
    %23 = vector.extract_strided_slice %19 {offsets = [1, 0, 0], sizes = [1, 4, 3], strides = [1, 1, 1]} : vector<8x4x3xf32> to vector<1x4x3xf32>
    %24 = arith.subf %22, %23 : vector<1x4x3xf32>
    %25 = vector.extract_strided_slice %19 {offsets = [7, 0, 0], sizes = [1, 4, 3], strides = [1, 1, 1]} : vector<8x4x3xf32> to vector<1x4x3xf32>
    %cst_10 = arith.constant 2.000000e+00 : f32
    %26 = vector.broadcast %cst_10 : f32 to vector<1x4x3xf32>
    %27 = arith.mulf %26, %25 : vector<1x4x3xf32>
    %28 = vector.extract_strided_slice %19 {offsets = [6, 0, 0], sizes = [1, 4, 3], strides = [1, 1, 1]} : vector<8x4x3xf32> to vector<1x4x3xf32>
    %29 = arith.subf %27, %28 : vector<1x4x3xf32>
    %30 = tpu.concatenate %24, %19, %29 in 0 : vector<1x4x3xf32>, vector<8x4x3xf32>, vector<1x4x3xf32> -> vector<10x4x3xf32>
    %31 = vector.extract_strided_slice %30 {offsets = [2, 0, 0], sizes = [8, 4, 3], strides = [1, 1, 1]} : vector<10x4x3xf32> to vector<8x4x3xf32>
    %32 = vector.extract_strided_slice %30 {offsets = [0, 0, 0], sizes = [8, 4, 3], strides = [1, 1, 1]} : vector<10x4x3xf32> to vector<8x4x3xf32>
    %33 = arith.subf %31, %32 : vector<8x4x3xf32>
    %cst_11 = arith.constant 5.000000e-01 : f32
    %34 = vector.broadcast %cst_11 : f32 to vector<8x4x3xf32>
    %35 = arith.mulf %33, %34 : vector<8x4x3xf32>
    %36 = vector.extract_strided_slice %19 {offsets = [0, 1, 0], sizes = [8, 3, 3], strides = [1, 1, 1]} : vector<8x4x3xf32> to vector<8x3x3xf32>
    %37 = vector.extract_strided_slice %35 {offsets = [0, 1, 0], sizes = [8, 3, 3], strides = [1, 1, 1]} : vector<8x4x3xf32> to vector<8x3x3xf32>
    %38 = vector.extract_strided_slice %1 {offsets = [0, 1, 0], sizes = [8, 3, 3], strides = [1, 1, 1]} : vector<8x4x3xf32> to vector<8x3x3xf32>
    %39 = vector.extract_strided_slice %1 {offsets = [0, 0, 0], sizes = [8, 1, 3], strides = [1, 1, 1]} : vector<8x4x3xf32> to vector<8x1x3xf32>
    %40 = vector.broadcast %39 : vector<8x1x3xf32> to vector<8x3x3xf32>
    %41 = arith.subf %38, %40 : vector<8x3x3xf32>
    %42 = arith.mulf %36, %36 : vector<8x3x3xf32>
    %cst_12 = arith.constant dense<0.000000e+00> : vector<8x3xf32>
    %43 = vector.multi_reduction <add>, %42, %cst_12 [2] : vector<8x3x3xf32> to vector<8x3xf32>
    %44 = vector.shape_cast %43 : vector<8x3xf32> to vector<8x3x1xf32>
    %45 = math.sqrt %44 : vector<8x3x1xf32>
    %46 = arith.mulf %37, %37 : vector<8x3x3xf32>
    %cst_13 = arith.constant dense<0.000000e+00> : vector<8x3xf32>
    %47 = vector.multi_reduction <add>, %46, %cst_13 [2] : vector<8x3x3xf32> to vector<8x3xf32>
    %48 = vector.shape_cast %47 : vector<8x3xf32> to vector<8x3x1xf32>
    %49 = math.sqrt %48 : vector<8x3x1xf32>
    %50 = arith.mulf %41, %41 : vector<8x3x3xf32>
    %cst_14 = arith.constant dense<0.000000e+00> : vector<8x3xf32>
    %51 = vector.multi_reduction <add>, %50, %cst_14 [2] : vector<8x3x3xf32> to vector<8x3xf32>
    %52 = vector.shape_cast %51 : vector<8x3xf32> to vector<8x3x1xf32>
    %53 = math.sqrt %52 : vector<8x3x1xf32>
    %54 = vector.extract_strided_slice %1 {offsets = [0, 1, 2], sizes = [8, 3, 1], strides = [1, 1, 1]} : vector<8x4x3xf32> to vector<8x3x1xf32>
    %55 = vector.shape_cast %49 : vector<8x3x1xf32> to vector<8x3x1xf32>
    %56 = vector.broadcast %55 : vector<8x3x1xf32> to vector<8x3x10xf32>
    %57 = vector.shape_cast %54 : vector<8x3x1xf32> to vector<8x3x1xf32>
    %58 = vector.broadcast %57 : vector<8x3x1xf32> to vector<8x3x10xf32>
    %59 = vector.shape_cast %45 : vector<8x3x1xf32> to vector<8x3x1xf32>
    %60 = vector.broadcast %59 : vector<8x3x1xf32> to vector<8x3x10xf32>
    %61 = vector.shape_cast %53 : vector<8x3x1xf32> to vector<8x3x1xf32>
    %62 = vector.broadcast %61 : vector<8x3x1xf32> to vector<8x3x10xf32>
    %63 = tpu.concatenate %56, %58, %60, %62 in 2 : vector<8x3x10xf32>, vector<8x3x10xf32>, vector<8x3x10xf32>, vector<8x3x10xf32> -> vector<8x3x40xf32>
    %64 = vector.broadcast %2 : vector<1x1x40xf32> to vector<8x3x40xf32>
    %65 = arith.subf %63, %64 : vector<8x3x40xf32>
    %66 = vector.broadcast %3 : f32 to vector<8x3x40xf32>
    %67 = arith.mulf %65, %66 : vector<8x3x40xf32>
    %68 = arith.negf %67 : vector<8x3x40xf32>
    %69 = math.exp %68 : vector<8x3x40xf32>
    %cst_15 = arith.constant 1.000000e+00 : f32
    %70 = vector.broadcast %cst_15 : f32 to vector<8x3x40xf32>
    %71 = arith.addf %70, %69 : vector<8x3x40xf32>
    %72 = arith.divf %70, %71 : vector<8x3x40xf32>
    %c0_16 = arith.constant 0 : index
    %c0_17 = arith.constant 0 : index
    %c0_18 = arith.constant 0 : index
    %c0_19 = arith.constant 0 : index
    %73 = vector.load %arg4[%c0_16, %c0_17, %c0_18, %c0_19] : memref<1x8x3x40xf32, #tpu.memory_space<vmem>>, vector<1x8x3x40xf32>
    %74 = vector.shape_cast %73 : vector<1x8x3x40xf32> to vector<8x3x40xf32>
    %75 = vector.shape_cast %72 : vector<8x3x40xf32> to vector<1x8x3x40xf32>
    tpu.vector_store %arg4[%c0_16, %c0_17, %c0_18, %c0_19], %75 {strides = array<i32>} : memref<1x8x3x40xf32, #tpu.memory_space<vmem>>, vector<1x8x3x40xf32>,
    return
  }
  func.func @transform_0(%arg0: i32) -> (i32, i32, i32, i32) {
    %c0_i32 = arith.constant 0 : i32
    %c0_i32_0 = arith.constant 0 : i32
    %c0_i32_1 = arith.constant 0 : i32
    %c0_i32_2 = arith.constant 0 : i32
    return %arg0, %c0_i32, %c0_i32_0, %c0_i32_1 : i32, i32, i32, i32
  }
  func.func @transform_1(%arg0: i32) -> (i32, i32, i32) {
    %c0_i32 = arith.constant 0 : i32
    %c0_i32_0 = arith.constant 0 : i32
    %c0_i32_1 = arith.constant 0 : i32
    %c0_i32_2 = arith.constant 0 : i32
    return %c0_i32, %c0_i32_0, %c0_i32_1 : i32, i32, i32
  }
  func.func @transform_2(%arg0: i32) -> i32 {
    %c0_i32 = arith.constant 0 : i32
    %c0_i32_0 = arith.constant 0 : i32
    return %c0_i32 : i32
  }
  func.func @transform_3(%arg0: i32) -> (i32, i32, i32, i32) {
    %c0_i32 = arith.constant 0 : i32
    %c0_i32_0 = arith.constant 0 : i32
    %c0_i32_1 = arith.constant 0 : i32
    %c0_i32_2 = arith.constant 0 : i32
    return %arg0, %c0_i32, %c0_i32_0, %c0_i32_1 : i32, i32, i32, i32
  }
}

</mosaic_0001>

<llo_original>
// kernel: tpu_custom_call.1
$region0: #{tpu_custom_call.1}
  #allocation0 [shape = 'u32[]', space=smem, size = 0x4, offset = 0x4, fixed_abs, tag = 'smem constant byte address 0x4 - core index']
  #allocation1 [shape = 'u32[144,128]{1,0:T(1,128)}', space=vmem, size = 0x12000, scoped, tag = 'internal scratch']
  #allocation2 [shape = 'f32[1]{0:T(128)S(6)}', space=smem, size = 0x200, scoped, tag = 'scoped memory for tpu_custom_call.1']
  %s0 = inlined_call_operand.vmem [shape: f32[2,8,4,3], index: 0, kind: input, shape index: {}]
  %s1 = inlined_call_operand.vmem [shape: f32[1,1,40], index: 1, kind: input, shape index: {}]
  %s2 = inlined_call_operand.<no memory space> [shape: f32[1], index: 2, kind: input, shape index: {}]
  %s3 = inlined_call_operand.vmem [shape: f32[2,8,3,40], index: 3, kind: output, shape index: {}]
  %s4 = sld [smem:[#allocation0]]
  $region45: #{tpu_custom_call.1} parent=0
    _
  %s6 = ssub.s32 1, %s4
  %s7 = scalar_select 0, %s6, %s4
  %8 = sst [smem:[#allocation2]] %s2
  loop: start=0, step=1, limit=4
  $region2: #{tpu_custom_call.1} parent=0 // loop_pre_header
    _
  $region3: #{tpu_custom_call.1} parent=0 // loop_header
    %s10 = sphi 0, %s14
    %p11 = scmp.ge.s32.totalorder %s10, 4
    %s20 = sphi 0, %s22
    %s23 = sphi 0, %s20
    %s24 = sphi 0, %s23
    %s40 = sphi 0, %s24
    %s44 = sphi 0, %s44
    %s46 = sphi 0, %s44
    %s47 = sphi 0, %s46
    %s61 = sphi 0, %s47
    %s65 = sphi 0, %s65
    %s67 = sphi 0, %s65
    %s68 = sphi 0, %s67
    %s82 = sphi 0, %s68
    %s88 = sphi 0, %s90
    %s91 = sphi 0, %s88
    %s92 = sphi 0, %s91
    %s108 = sphi 0, %s92
  $region4: #{tpu_custom_call.1} parent=0 // loop_header_branch
    %13 = sbr.rel (%p11) target = $region8
  $region5: #{tpu_custom_call.1} parent=0 // loop_body
    %s15 = ssub.s32 %s10, 1
    %s16 = ssub.s32 %s10, 2
    %s17 = sadd.s32 %s10, 1
    %s18 = ssub.s32 %s10, %s17
    %p19 = scmp.eq.s32.totalorder %s18, 0
    %s21 = sadd.s32 %s20, 1
    %s22 = scalar_select %p19, %s20, %s21
    %p25 = pneg %p19
    %p26 = scmp.eq.s32.totalorder %s10, 1
    %p27 = por %p25, %p26
    %p28 = scmp.ne.s32.totalorder %s20, %s23
    %p29 = scmp.eq.s32.totalorder %s10, 0
    %p30 = por %p28, %p29
    %p31 = scmp.ne.s32.totalorder %s20, %s23
    %p32 = scmp.eq.s32.totalorder %s15, 1
    %p33 = por %p31, %p32
    %p34 = scmp.ne.s32.totalorder %s23, %s24
    %p35 = scmp.eq.s32.totalorder %s15, 0
    %p36 = por %p34, %p35
    %p37 = scmp.ne.s32.totalorder %s23, %s24
    %p38 = scmp.eq.s32.totalorder %s16, 1
    %p39 = por %p37, %p38
    %p41 = scmp.ne.s32.totalorder %s24, %s40
    %p42 = scmp.eq.s32.totalorder %s16, 0
    %p43 = por %p41, %p42
    %s45 = sadd.s32 %s44, 1
    %p48 = scmp.eq.s32.totalorder %s10, 1
    %p49 = scmp.ne.s32.totalorder %s44, %s46
    %p50 = scmp.eq.s32.totalorder %s10, 0
    %p51 = por %p49, %p50
    %p52 = scmp.ne.s32.totalorder %s44, %s46
    %p53 = scmp.eq.s32.totalorder %s15, 1
    %p54 = por %p52, %p53
    %p55 = scmp.ne.s32.totalorder %s46, %s47
    %p56 = scmp.eq.s32.totalorder %s15, 0
    %p57 = por %p55, %p56
    %p58 = scmp.ne.s32.totalorder %s46, %s47
    %p59 = scmp.eq.s32.totalorder %s16, 1
    %p60 = por %p58, %p59
    %p62 = scmp.ne.s32.totalorder %s47, %s61
    %p63 = scmp.eq.s32.totalorder %s16, 0
    %p64 = por %p62, %p63
    %s66 = sadd.s32 %s65, 1
    %p69 = scmp.eq.s32.totalorder %s10, 1
    %p70 = scmp.ne.s32.totalorder %s65, %s67
    %p71 = scmp.eq.s32.totalorder %s10, 0
    %p72 = por %p70, %p71
    %p73 = scmp.ne.s32.totalorder %s65, %s67
    %p74 = scmp.eq.s32.totalorder %s15, 1
    %p75 = por %p73, %p74
    %p76 = scmp.ne.s32.totalorder %s67, %s68
    %p77 = scmp.eq.s32.totalorder %s15, 0
    %p78 = por %p76, %p77
    %p79 = scmp.ne.s32.totalorder %s67, %s68
    %p80 = scmp.eq.s32.totalorder %s16, 1
    %p81 = por %p79, %p80
    %p83 = scmp.ne.s32.totalorder %s68, %s82
    %p84 = scmp.eq.s32.totalorder %s16, 0
    %p85 = por %p83, %p84
    %s86 = ssub.s32 %s10, %s17
    %p87 = scmp.eq.s32.totalorder %s86, 0
    %s89 = sadd.s32 %s88, 1
    %s90 = scalar_select %p87, %s88, %s89
    %p93 = pneg %p87
    %p94 = scmp.eq.s32.totalorder %s10, 1
    %p95 = por %p93, %p94
    %p96 = scmp.ne.s32.totalorder %s88, %s91
    %p97 = scmp.eq.s32.totalorder %s10, 0
    %p98 = por %p96, %p97
    %p99 = scmp.ne.s32.totalorder %s88, %s91
    %p100 = scmp.eq.s32.totalorder %s15, 1
    %p101 = por %p99, %p100
    %p102 = scmp.ne.s32.totalorder %s91, %s92
    %p103 = scmp.eq.s32.totalorder %s15, 0
    %p104 = por %p102, %p103
    %p105 = scmp.ne.s32.totalorder %s91, %s92
    %p106 = scmp.eq.s32.totalorder %s16, 1
    %p107 = por %p105, %p106
    %p109 = scmp.ne.s32.totalorder %s92, %s108
    %p110 = scmp.eq.s32.totalorder %s16, 0
    %p111 = por %p109, %p110
    %p112 = scmp.le.s32.totalorder 1, %s10
    %p113 = scmp.lt.s32.totalorder %s10, 3
    %p114 = pnand %p112, %p113
    %p115 = pneg %p114
    // Predicated region
    $region9: #{tpu_custom_call.1} parent=5 // pred_check
      _
    $region10: #{tpu_custom_call.1} parent=5 // pred_check_branch
      %117 = sbr.rel (%p114) target = $region12
    $region11: #{tpu_custom_call.1} parent=5 // pred_region
      %s118 = ssub.s32 %s10, 1
      // Predicated region
      $region13: #{tpu_custom_call.1} parent=11 // pred_check
        %p119 = pneg %p57
      $region14: #{tpu_custom_call.1} parent=11 // pred_check_branch
        %121 = sbr.rel (%p119) target = $region16
      $region15: #{tpu_custom_call.1} parent=11 // pred_region
        _
      $region16: #{tpu_custom_call.1} parent=11 // pred_fallthru
        _
      // Predicated region
      $region17: #{tpu_custom_call.1} parent=11 // pred_check
        %p122 = pneg %p78
      $region18: #{tpu_custom_call.1} parent=11 // pred_check_branch
        %124 = sbr.rel (%p122) target = $region20
      $region19: #{tpu_custom_call.1} parent=11 // pred_region
        _
      $region20: #{tpu_custom_call.1} parent=11 // pred_fallthru
        _
    $region12: #{tpu_custom_call.1} parent=5 // pred_fallthru
      _
    %p125 = scmp.lt.s32.totalorder %s10, 2
    // Predicated region
    $region21: #{tpu_custom_call.1} parent=5 // pred_check
      %p126 = pneg %p125
    $region22: #{tpu_custom_call.1} parent=5 // pred_check_branch
      %128 = sbr.rel (%p126) target = $region24
    $region23: #{tpu_custom_call.1} parent=5 // pred_region
      // Predicated region
      $region25: #{tpu_custom_call.1} parent=23 // pred_check
        %p129 = pneg %p30
      $region26: #{tpu_custom_call.1} parent=23 // pred_check_branch
        %131 = sbr.rel (%p129) target = $region28
      $region27: #{tpu_custom_call.1} parent=23 // pred_region
        %p132 = scmp.lt.s32.totalorder %s10, 1
        %s133 = scalar_select %p132, %s10, 1
        %s134 = smul.addr %s133, 8
        %s135 = smul.addr %s134, 4
        %s136 = scalar_lea.vmem %s0, %s135
      $region28: #{tpu_custom_call.1} parent=23 // pred_fallthru
        _
    $region24: #{tpu_custom_call.1} parent=5 // pred_fallthru
      _
    %p137 = scmp.le.s32.totalorder 1, %s10
    %p138 = scmp.lt.s32.totalorder %s10, 3
    %p139 = pnand %p137, %p138
    %p140 = pneg %p139
    // Predicated region
    $region29: #{tpu_custom_call.1} parent=5 // pred_check
      _
    $region30: #{tpu_custom_call.1} parent=5 // pred_check_branch
      %142 = sbr.rel (%p139) target = $region32
    $region31: #{tpu_custom_call.1} parent=5 // pred_region
      %s143 = ssub.s32 %s10, 1
      %p144 = scmp.lt.s32.totalorder %s15, 1
      %s145 = scalar_select %p144, %s15, 1
      %s146 = smul.addr %s145, 8
      %s147 = smul.addr %s146, 4
      %s148 = scalar_lea.vmem %s0, %s147
      %p149 = pneg %p36
      %p150 = pneg %p33
      %p151 = pneg %p57
      %p152 = pneg %p54
      %p153 = pneg %p78
      %p154 = pneg %p75
      %p155 = pneg %p104
      %p156 = pneg %p101
      %p157 = scmp.lt.s32.totalorder %s15, 1
      %s158 = scalar_select %p157, %s15, 1
      %s159 = smul.addr %s158, 8
      %s160 = smul.addr %s159, 4
      %s161 = scalar_lea.vmem %s3, %s160
      %p162 = scmp.lt.s32.totalorder %s15, 1
      %s163 = scalar_select %p162, %s15, 1
      %s164 = smul.addr %s163, 8
      %s165 = smul.addr %s164, 4
      %s166 = scalar_lea.vmem %s0, %s165
      %p167 = scmp.lt.s32.totalorder %s15, 1
      %s168 = scalar_select %p167, %s15, 1
      %s169 = smul.addr %s168, 8
      %s170 = smul.addr %s169, 4
      %s171 = scalar_lea.vmem %s3, %s170
      %v172 = vld [vmem:[%s166] sm:$0xf]
      %v173 = vld [vmem:[%s166 + $0x4] sm:$0xf]
      %v174 = vld [vmem:[%s166 + $0x8] sm:$0xf]
      %v175 = vld [vmem:[%s166 + $0xc] sm:$0xf]
      %v176 = vld [vmem:[%s166 + $0x10] sm:$0xf]
      %v177 = vld [vmem:[%s166 + $0x14] sm:$0xf]
      %v178 = vld [vmem:[%s166 + $0x18] sm:$0xf]
      %v179 = vld [vmem:[%s166 + $0x1c] sm:$0xf]
      %v180 = vld [vmem:[%s1] sm:$0x1]
      %s181 = sld [smem:[#allocation2]]
      %v182 = vmul.f32 %v172, 2.0
      %v183 = vsub.f32 %v182, %v173
      %v184 = vmul.f32 %v179, 2.0
      %v185 = vsub.f32 %v184, %v178
      %v186 = vsub.f32 %v173, %v183
      %v187 = vsub.f32 %v174, %v172
      %v188 = vsub.f32 %v175, %v173
      %v189 = vsub.f32 %v176, %v174
      %v190 = vsub.f32 %v177, %v175
      %v191 = vsub.f32 %v178, %v176
      %v192 = vsub.f32 %v179, %v177
      %v193 = vsub.f32 %v185, %v178
      %v194 = vmul.f32 %v186, 0.5
      %v195 = vmul.f32 %v187, 0.5
      %v196 = vmul.f32 %v188, 0.5
      %v197 = vmul.f32 %v189, 0.5
      %v198 = vmul.f32 %v190, 0.5
      %v199 = vmul.f32 %v191, 0.5
      %v200 = vmul.f32 %v192, 0.5
      %v201 = vmul.f32 %v193, 0.5
      %v202 = vmul.f32 %v194, 2.0
      %v203 = vsub.f32 %v202, %v195
      %v204 = vmul.f32 %v201, 2.0
      %v205 = vsub.f32 %v204, %v200
      %v206 = vsub.f32 %v195, %v203
      %v207 = vsub.f32 %v196, %v194
      %v208 = vsub.f32 %v197, %v195
      %v209 = vsub.f32 %v198, %v196
      %v210 = vsub.f32 %v199, %v197
      %v211 = vsub.f32 %v200, %v198
      %v212 = vsub.f32 %v201, %v199
      %v213 = vsub.f32 %v205, %v200
      %v214 = vmul.f32 %v206, 0.5
      %v215 = vmul.f32 %v207, 0.5
      %v216 = vmul.f32 %v208, 0.5
      %v217 = vmul.f32 %v209, 0.5
      %v218 = vmul.f32 %v210, 0.5
      %v219 = vmul.f32 %v211, 0.5
      %v220 = vmul.f32 %v212, 0.5
      %v221 = vmul.f32 %v213, 0.5
      %v222 = vlaneseq
      %v223 = vshrl.u32 %v222, 7
      %v224 = vsub.s32 0, %v223
      %v225 = vrot.slane %v172, %v224
      %v226 = vlaneseq
      %v227 = vshrl.u32 %v226, 7
      %v228 = vsub.s32 0, %v227
      %v229 = vrot.slane %v173, %v228
      %v230 = vlaneseq
      %v231 = vshrl.u32 %v230, 7
      %v232 = vsub.s32 0, %v231
      %v233 = vrot.slane %v174, %v232
      %v234 = vlaneseq
      %v235 = vshrl.u32 %v234, 7
      %v236 = vsub.s32 0, %v235
      %v237 = vrot.slane %v175, %v236
      %v238 = vlaneseq
      %v239 = vshrl.u32 %v238, 7
      %v240 = vsub.s32 0, %v239
      %v241 = vrot.slane %v176, %v240
      %v242 = vlaneseq
      %v243 = vshrl.u32 %v242, 7
      %v244 = vsub.s32 0, %v243
      %v245 = vrot.slane %v177, %v244
      %v246 = vlaneseq
      %v247 = vshrl.u32 %v246, 7
      %v248 = vsub.s32 0, %v247
      %v249 = vrot.slane %v178, %v248
      %v250 = vlaneseq
      %v251 = vshrl.u32 %v250, 7
      %v252 = vsub.s32 0, %v251
      %v253 = vrot.slane %v179, %v252
      %v254 = vsub.f32 %v172, %v225
      %v255 = vsub.f32 %v173, %v229
      %v256 = vsub.f32 %v174, %v233
      %v257 = vsub.f32 %v175, %v237
      %v258 = vsub.f32 %v176, %v241
      %v259 = vsub.f32 %v177, %v245
      %v260 = vsub.f32 %v178, %v249
      %v261 = vsub.f32 %v179, %v253
      %v262 = vmul.f32 %v194, %v194
      %v263 = vmul.f32 %v195, %v195
      %v264 = vmul.f32 %v196, %v196
      %v265 = vmul.f32 %v197, %v197
      %v266 = vmul.f32 %v198, %v198
      %v267 = vmul.f32 %v199, %v199
      %v268 = vmul.f32 %v200, %v200
      %v269 = vmul.f32 %v201, %v201
      %vm270 = vcmask 19457
      %v271 = vsel %vm270, %v262, 0.0
      %272 = vadd.xlane.f32.xlu0 %v271
      %v273 = vpop.xlane.xlu0 %272
      %v274 = vsel %vm270, %v263, 0.0
      %275 = vadd.xlane.f32.xlu0 %v274
      %v276 = vpop.xlane.xlu0 %275
      %v277 = vsel %vm270, %v264, 0.0
      %278 = vadd.xlane.f32.xlu0 %v277
      %v279 = vpop.xlane.xlu0 %278
      %v280 = vsel %vm270, %v265, 0.0
      %281 = vadd.xlane.f32.xlu0 %v280
      %v282 = vpop.xlane.xlu0 %281
      %v283 = vsel %vm270, %v266, 0.0
      %284 = vadd.xlane.f32.xlu0 %v283
      %v285 = vpop.xlane.xlu0 %284
      %v286 = vsel %vm270, %v267, 0.0
      %287 = vadd.xlane.f32.xlu0 %v286
      %v288 = vpop.xlane.xlu0 %287
      %v289 = vsel %vm270, %v268, 0.0
      %290 = vadd.xlane.f32.xlu0 %v289
      %v291 = vpop.xlane.xlu0 %290
      %v292 = vsel %vm270, %v269, 0.0
      %293 = vadd.xlane.f32.xlu0 %v292
      %v294 = vpop.xlane.xlu0 %293
      %v295 = vrsqrt.pop %v273
      %v296 = vmul.f32 %v273, %v295
      %vm297 = vcmp.eq.f32.partialorder %v273, inf
      %v298 = vsel %vm297, %v273, %v296
      %vm299 = vcmp.eq.f32.partialorder %v273, 0.0
      %v300 = vand.u32 %v273, 2147483648
      %v301 = vsel %vm299, %v300, %v298
      %v302 = vrsqrt.pop %v276
      %v303 = vmul.f32 %v276, %v302
      %vm304 = vcmp.eq.f32.partialorder %v276, inf
      %v305 = vsel %vm304, %v276, %v303
      %vm306 = vcmp.eq.f32.partialorder %v276, 0.0
      %v307 = vand.u32 %v276, 2147483648
      %v308 = vsel %vm306, %v307, %v305
      %v309 = vrsqrt.pop %v279
      %v310 = vmul.f32 %v279, %v309
      %vm311 = vcmp.eq.f32.partialorder %v279, inf
      %v312 = vsel %vm311, %v279, %v310
      %vm313 = vcmp.eq.f32.partialorder %v279, 0.0
      %v314 = vand.u32 %v279, 2147483648
      %v315 = vsel %vm313, %v314, %v312
      %v316 = vrsqrt.pop %v282
      %v317 = vmul.f32 %v282, %v316
      %vm318 = vcmp.eq.f32.partialorder %v282, inf
      %v319 = vsel %vm318, %v282, %v317
      %vm320 = vcmp.eq.f32.partialorder %v282, 0.0
      %v321 = vand.u32 %v282, 2147483648
      %v322 = vsel %vm320, %v321, %v319
      %v323 = vrsqrt.pop %v285
      %v324 = vmul.f32 %v285, %v323
      %vm325 = vcmp.eq.f32.partialorder %v285, inf
      %v326 = vsel %vm325, %v285, %v324
      %vm327 = vcmp.eq.f32.partialorder %v285, 0.0
      %v328 = vand.u32 %v285, 2147483648
      %v329 = vsel %vm327, %v328, %v326
      %v330 = vrsqrt.pop %v288
      %v331 = vmul.f32 %v288, %v330
      %vm332 = vcmp.eq.f32.partialorder %v288, inf
      %v333 = vsel %vm332, %v288, %v331
      %vm334 = vcmp.eq.f32.partialorder %v288, 0.0
      %v335 = vand.u32 %v288, 2147483648
      %v336 = vsel %vm334, %v335, %v333
      %v337 = vrsqrt.pop %v291
      %v338 = vmul.f32 %v291, %v337
      %vm339 = vcmp.eq.f32.partialorder %v291, inf
      %v340 = vsel %vm339, %v291, %v338
      %vm341 = vcmp.eq.f32.partialorder %v291, 0.0
      %v342 = vand.u32 %v291, 2147483648
      %v343 = vsel %vm341, %v342, %v340
      %v344 = vrsqrt.pop %v294
      %v345 = vmul.f32 %v294, %v344
      %vm346 = vcmp.eq.f32.partialorder %v294, inf
      %v347 = vsel %vm346, %v294, %v345
      %vm348 = vcmp.eq.f32.partialorder %v294, 0.0
      %v349 = vand.u32 %v294, 2147483648
      %v350 = vsel %vm348, %v349, %v347
      %v351 = vmul.f32 %v214, %v214
      %v352 = vmul.f32 %v215, %v215
      %v353 = vmul.f32 %v216, %v216
      %v354 = vmul.f32 %v217, %v217
      %v355 = vmul.f32 %v218, %v218
      %v356 = vmul.f32 %v219, %v219
      %v357 = vmul.f32 %v220, %v220
      %v358 = vmul.f32 %v221, %v221
      %v359 = vsel %vm270, %v351, 0.0
      %360 = vadd.xlane.f32.xlu0 %v359
      %v361 = vpop.xlane.xlu0 %360
      %v362 = vsel %vm270, %v352, 0.0
      %363 = vadd.xlane.f32.xlu0 %v362
      %v364 = vpop.xlane.xlu0 %363
      %v365 = vsel %vm270, %v353, 0.0
      %366 = vadd.xlane.f32.xlu0 %v365
      %v367 = vpop.xlane.xlu0 %366
      %v368 = vsel %vm270, %v354, 0.0
      %369 = vadd.xlane.f32.xlu0 %v368
      %v370 = vpop.xlane.xlu0 %369
      %v371 = vsel %vm270, %v355, 0.0
      %372 = vadd.xlane.f32.xlu0 %v371
      %v373 = vpop.xlane.xlu0 %372
      %v374 = vsel %vm270, %v356, 0.0
      %375 = vadd.xlane.f32.xlu0 %v374
      %v376 = vpop.xlane.xlu0 %375
      %v377 = vsel %vm270, %v357, 0.0
      %378 = vadd.xlane.f32.xlu0 %v377
      %v379 = vpop.xlane.xlu0 %378
      %v380 = vsel %vm270, %v358, 0.0
      %381 = vadd.xlane.f32.xlu0 %v380
      %v382 = vpop.xlane.xlu0 %381
      %v383 = vrsqrt.pop %v361
      %v384 = vmul.f32 %v361, %v383
      %vm385 = vcmp.eq.f32.partialorder %v361, inf
      %v386 = vsel %vm385, %v361, %v384
      %vm387 = vcmp.eq.f32.partialorder %v361, 0.0
      %v388 = vand.u32 %v361, 2147483648
      %v389 = vsel %vm387, %v388, %v386
      %v390 = vrsqrt.pop %v364
      %v391 = vmul.f32 %v364, %v390
      %vm392 = vcmp.eq.f32.partialorder %v364, inf
      %v393 = vsel %vm392, %v364, %v391
      %vm394 = vcmp.eq.f32.partialorder %v364, 0.0
      %v395 = vand.u32 %v364, 2147483648
      %v396 = vsel %vm394, %v395, %v393
      %v397 = vrsqrt.pop %v367
      %v398 = vmul.f32 %v367, %v397
      %vm399 = vcmp.eq.f32.partialorder %v367, inf
      %v400 = vsel %vm399, %v367, %v398
      %vm401 = vcmp.eq.f32.partialorder %v367, 0.0
      %v402 = vand.u32 %v367, 2147483648
      %v403 = vsel %vm401, %v402, %v400
      %v404 = vrsqrt.pop %v370
      %v405 = vmul.f32 %v370, %v404
      %vm406 = vcmp.eq.f32.partialorder %v370, inf
      %v407 = vsel %vm406, %v370, %v405
      %vm408 = vcmp.eq.f32.partialorder %v370, 0.0
      %v409 = vand.u32 %v370, 2147483648
      %v410 = vsel %vm408, %v409, %v407
      %v411 = vrsqrt.pop %v373
      %v412 = vmul.f32 %v373, %v411
      %vm413 = vcmp.eq.f32.partialorder %v373, inf
      %v414 = vsel %vm413, %v373, %v412
      %vm415 = vcmp.eq.f32.partialorder %v373, 0.0
      %v416 = vand.u32 %v373, 2147483648
      %v417 = vsel %vm415, %v416, %v414
      %v418 = vrsqrt.pop %v376
      %v419 = vmul.f32 %v376, %v418
      %vm420 = vcmp.eq.f32.partialorder %v376, inf
      %v421 = vsel %vm420, %v376, %v419
      %vm422 = vcmp.eq.f32.partialorder %v376, 0.0
      %v423 = vand.u32 %v376, 2147483648
      %v424 = vsel %vm422, %v423, %v421
      %v425 = vrsqrt.pop %v379
      %v426 = vmul.f32 %v379, %v425
      %vm427 = vcmp.eq.f32.partialorder %v379, inf
      %v428 = vsel %vm427, %v379, %v426
      %vm429 = vcmp.eq.f32.partialorder %v379, 0.0
      %v430 = vand.u32 %v379, 2147483648
      %v431 = vsel %vm429, %v430, %v428
      %v432 = vrsqrt.pop %v382
      %v433 = vmul.f32 %v382, %v432
      %vm434 = vcmp.eq.f32.partialorder %v382, inf
      %v435 = vsel %vm434, %v382, %v433
      %vm436 = vcmp.eq.f32.partialorder %v382, 0.0
      %v437 = vand.u32 %v382, 2147483648
      %v438 = vsel %vm436, %v437, %v435
      %v439 = vmul.f32 %v254, %v254
      %v440 = vmul.f32 %v255, %v255
      %v441 = vmul.f32 %v256, %v256
      %v442 = vmul.f32 %v257, %v257
      %v443 = vmul.f32 %v258, %v258
      %v444 = vmul.f32 %v259, %v259
      %v445 = vmul.f32 %v260, %v260
      %v446 = vmul.f32 %v261, %v261
      %v447 = vsel %vm270, %v439, 0.0
      %448 = vadd.xlane.f32.xlu0 %v447
      %v449 = vpop.xlane.xlu0 %448
      %v450 = vsel %vm270, %v440, 0.0
      %451 = vadd.xlane.f32.xlu0 %v450
      %v452 = vpop.xlane.xlu0 %451
      %v453 = vsel %vm270, %v441, 0.0
      %454 = vadd.xlane.f32.xlu0 %v453
      %v455 = vpop.xlane.xlu0 %454
      %v456 = vsel %vm270, %v442, 0.0
      %457 = vadd.xlane.f32.xlu0 %v456
      %v458 = vpop.xlane.xlu0 %457
      %v459 = vsel %vm270, %v443, 0.0
      %460 = vadd.xlane.f32.xlu0 %v459
      %v461 = vpop.xlane.xlu0 %460
      %v462 = vsel %vm270, %v444, 0.0
      %463 = vadd.xlane.f32.xlu0 %v462
      %v464 = vpop.xlane.xlu0 %463
      %v465 = vsel %vm270, %v445, 0.0
      %466 = vadd.xlane.f32.xlu0 %v465
      %v467 = vpop.xlane.xlu0 %466
      %v468 = vsel %vm270, %v446, 0.0
      %469 = vadd.xlane.f32.xlu0 %v468
      %v470 = vpop.xlane.xlu0 %469
      %v471 = vrsqrt.pop %v449
      %v472 = vmul.f32 %v449, %v471
      %vm473 = vcmp.eq.f32.partialorder %v449, inf
      %v474 = vsel %vm473, %v449, %v472
      %vm475 = vcmp.eq.f32.partialorder %v449, 0.0
      %v476 = vand.u32 %v449, 2147483648
      %v477 = vsel %vm475, %v476, %v474
      %v478 = vrsqrt.pop %v452
      %v479 = vmul.f32 %v452, %v478
      %vm480 = vcmp.eq.f32.partialorder %v452, inf
      %v481 = vsel %vm480, %v452, %v479
      %vm482 = vcmp.eq.f32.partialorder %v452, 0.0
      %v483 = vand.u32 %v452, 2147483648
      %v484 = vsel %vm482, %v483, %v481
      %v485 = vrsqrt.pop %v455
      %v486 = vmul.f32 %v455, %v485
      %vm487 = vcmp.eq.f32.partialorder %v455, inf
      %v488 = vsel %vm487, %v455, %v486
      %vm489 = vcmp.eq.f32.partialorder %v455, 0.0
      %v490 = vand.u32 %v455, 2147483648
      %v491 = vsel %vm489, %v490, %v488
      %v492 = vrsqrt.pop %v458
      %v493 = vmul.f32 %v458, %v492
      %vm494 = vcmp.eq.f32.partialorder %v458, inf
      %v495 = vsel %vm494, %v458, %v493
      %vm496 = vcmp.eq.f32.partialorder %v458, 0.0
      %v497 = vand.u32 %v458, 2147483648
      %v498 = vsel %vm496, %v497, %v495
      %v499 = vrsqrt.pop %v461
      %v500 = vmul.f32 %v461, %v499
      %vm501 = vcmp.eq.f32.partialorder %v461, inf
      %v502 = vsel %vm501, %v461, %v500
      %vm503 = vcmp.eq.f32.partialorder %v461, 0.0
      %v504 = vand.u32 %v461, 2147483648
      %v505 = vsel %vm503, %v504, %v502
      %v506 = vrsqrt.pop %v464
      %v507 = vmul.f32 %v464, %v506
      %vm508 = vcmp.eq.f32.partialorder %v464, inf
      %v509 = vsel %vm508, %v464, %v507
      %vm510 = vcmp.eq.f32.partialorder %v464, 0.0
      %v511 = vand.u32 %v464, 2147483648
      %v512 = vsel %vm510, %v511, %v509
      %v513 = vrsqrt.pop %v467
      %v514 = vmul.f32 %v467, %v513
      %vm515 = vcmp.eq.f32.partialorder %v467, inf
      %v516 = vsel %vm515, %v467, %v514
      %vm517 = vcmp.eq.f32.partialorder %v467, 0.0
      %v518 = vand.u32 %v467, 2147483648
      %v519 = vsel %vm517, %v518, %v516
      %v520 = vrsqrt.pop %v470
      %v521 = vmul.f32 %v470, %v520
      %vm522 = vcmp.eq.f32.partialorder %v470, inf
      %v523 = vsel %vm522, %v470, %v521
      %vm524 = vcmp.eq.f32.partialorder %v470, 0.0
      %v525 = vand.u32 %v470, 2147483648
      %v526 = vsel %vm524, %v525, %v523
      %528 = vset.pattern.permute.xlu0 2
      %529 = vperm.xlu0 %528, %v172
      %v530 = vpop.permute.xlu0 %529
      %533 = vset.pattern.permute.xlu0 2
      %534 = vperm.xlu0 %533, %v173
      %v535 = vpop.permute.xlu0 %534
      %538 = vset.pattern.permute.xlu0 2
      %539 = vperm.xlu0 %538, %v174
      %v540 = vpop.permute.xlu0 %539
      %543 = vset.pattern.permute.xlu0 2
      %544 = vperm.xlu0 %543, %v175
      %v545 = vpop.permute.xlu0 %544
      %548 = vset.pattern.permute.xlu0 2
      %549 = vperm.xlu0 %548, %v176
      %v550 = vpop.permute.xlu0 %549
      %553 = vset.pattern.permute.xlu0 2
      %554 = vperm.xlu0 %553, %v177
      %v555 = vpop.permute.xlu0 %554
      %558 = vset.pattern.permute.xlu0 2
      %559 = vperm.xlu0 %558, %v178
      %v560 = vpop.permute.xlu0 %559
      %563 = vset.pattern.permute.xlu0 2
      %564 = vperm.xlu0 %563, %v179
      %v565 = vpop.permute.xlu0 %564
      %vm567 = vcmask 80896
      %v568 = vsel %vm567, %v389, %v530
      %v569 = vsel %vm567, %v396, %v535
      %v570 = vsel %vm567, %v403, %v540
      %v571 = vsel %vm567, %v410, %v545
      %v572 = vsel %vm567, %v417, %v550
      %v573 = vsel %vm567, %v424, %v555
      %v574 = vsel %vm567, %v431, %v560
      %v575 = vsel %vm567, %v438, %v565
      %vm576 = vcmask 162816
      %v577 = vsel %vm576, %v568, %v301
      %v578 = vsel %vm576, %v569, %v308
      %v579 = vsel %vm576, %v570, %v315
      %v580 = vsel %vm576, %v571, %v322
      %v581 = vsel %vm576, %v572, %v329
      %v582 = vsel %vm576, %v573, %v336
      %v583 = vsel %vm576, %v574, %v343
      %v584 = vsel %vm576, %v575, %v350
      %vm585 = vcmask 244736
      %v586 = vsel %vm585, %v577, %v477
      %v587 = vsel %vm585, %v578, %v484
      %v588 = vsel %vm585, %v579, %v491
      %v589 = vsel %vm585, %v580, %v498
      %v590 = vsel %vm585, %v581, %v505
      %v591 = vsel %vm585, %v582, %v512
      %v592 = vsel %vm585, %v583, %v519
      %v593 = vsel %vm585, %v584, %v526
      %v595 = vlaneseq
      %v596 = vshrl.u32 %v595, 7
      %v597 = vsub.s32 0, %v596
      %v598 = vrot.slane %v180, %v597
      %v600 = vsub.f32 %v586, %v598
      %v601 = vsub.f32 %v587, %v598
      %v602 = vsub.f32 %v588, %v598
      %v603 = vsub.f32 %v589, %v598
      %v604 = vsub.f32 %v590, %v598
      %v605 = vsub.f32 %v591, %v598
      %v606 = vsub.f32 %v592, %v598
      %v607 = vsub.f32 %v593, %v598
      %v608 = vstv %s181
      %v609 = vmul.f32 %v600, %v608
      %v610 = vmul.f32 %v601, %v608
      %v611 = vmul.f32 %v602, %v608
      %v612 = vmul.f32 %v603, %v608
      %v613 = vmul.f32 %v604, %v608
      %v614 = vmul.f32 %v605, %v608
      %v615 = vmul.f32 %v606, %v608
      %v616 = vmul.f32 %v607, %v608
      %v617 = vxor.u32 %v609, 2147483648
      %v618 = vxor.u32 %v610, 2147483648
      %v619 = vxor.u32 %v611, 2147483648
      %v620 = vxor.u32 %v612, 2147483648
      %v621 = vxor.u32 %v613, 2147483648
      %v622 = vxor.u32 %v614, 2147483648
      %v623 = vxor.u32 %v615, 2147483648
      %v624 = vxor.u32 %v616, 2147483648
      %v625 = vmul.f32 %v617, 1.442695
      %v626 = vpow.pop %v625
      %v627 = vmul.f32 %v618, 1.442695
      %v628 = vpow.pop %v627
      %v629 = vmul.f32 %v619, 1.442695
      %v630 = vpow.pop %v629
      %v631 = vmul.f32 %v620, 1.442695
      %v632 = vpow.pop %v631
      %v633 = vmul.f32 %v621, 1.442695
      %v634 = vpow.pop %v633
      %v635 = vmul.f32 %v622, 1.442695
      %v636 = vpow.pop %v635
      %v637 = vmul.f32 %v623, 1.442695
      %v638 = vpow.pop %v637
      %v639 = vmul.f32 %v624, 1.442695
      %v640 = vpow.pop %v639
      %v641 = vadd.f32 %v626, 1.0
      %v642 = vadd.f32 %v628, 1.0
      %v643 = vadd.f32 %v630, 1.0
      %v644 = vadd.f32 %v632, 1.0
      %v645 = vadd.f32 %v634, 1.0
      %v646 = vadd.f32 %v636, 1.0
      %v647 = vadd.f32 %v638, 1.0
      %v648 = vadd.f32 %v640, 1.0
      %v649 = vrcp.pop %v641
      %v650 = vmul.f32 1.0, %v649
      %v651 = vrcp.pop %v642
      %v652 = vmul.f32 1.0, %v651
      %v653 = vrcp.pop %v643
      %v654 = vmul.f32 1.0, %v653
      %v655 = vrcp.pop %v644
      %v656 = vmul.f32 1.0, %v655
      %v657 = vrcp.pop %v645
      %v658 = vmul.f32 1.0, %v657
      %v659 = vrcp.pop %v646
      %v660 = vmul.f32 1.0, %v659
      %v661 = vrcp.pop %v647
      %v662 = vmul.f32 1.0, %v661
      %v663 = vrcp.pop %v648
      %v664 = vmul.f32 1.0, %v663
      %vm665 = vcmask 322561
      %666 = vst.msk [vmem:[%s171 - $0x1] sm:$0xe] %vm665, %v650
      %667 = vst.msk [vmem:[%s171 + $0x3] sm:$0xe] %vm665, %v652
      %668 = vst.msk [vmem:[%s171 + $0x7] sm:$0xe] %vm665, %v654
      %669 = vst.msk [vmem:[%s171 + $0xb] sm:$0xe] %vm665, %v656
      %670 = vst.msk [vmem:[%s171 + $0xf] sm:$0xe] %vm665, %v658
      %671 = vst.msk [vmem:[%s171 + $0x13] sm:$0xe] %vm665, %v660
      %672 = vst.msk [vmem:[%s171 + $0x17] sm:$0xe] %vm665, %v662
      %673 = vst.msk [vmem:[%s171 + $0x1b] sm:$0xe] %vm665, %v664
      %p674 = scmp.lt.s32.totalorder %s15, 1
      %s675 = scalar_select %p674, %s15, 1
      %s676 = smul.addr %s675, 8
      %s677 = smul.addr %s676, 4
      %s678 = scalar_lea.vmem %s3, %s677
      // Predicated region
      $region33: #{tpu_custom_call.1} parent=31 // pred_check
        %p679 = pneg %p101
      $region34: #{tpu_custom_call.1} parent=31 // pred_check_branch
        %681 = sbr.rel (%p679) target = $region36
      $region35: #{tpu_custom_call.1} parent=31 // pred_region
        _
      $region36: #{tpu_custom_call.1} parent=31 // pred_fallthru
        _
    $region32: #{tpu_custom_call.1} parent=5 // pred_fallthru
      _
    %p682 = scmp.le.s32.totalorder 2, %s10
    // Predicated region
    $region37: #{tpu_custom_call.1} parent=5 // pred_check
      %p683 = pneg %p682
    $region38: #{tpu_custom_call.1} parent=5 // pred_check_branch
      %685 = sbr.rel (%p683) target = $region40
    $region39: #{tpu_custom_call.1} parent=5 // pred_region
      %s686 = ssub.s32 %s10, 2
      // Predicated region
      $region41: #{tpu_custom_call.1} parent=39 // pred_check
        %p687 = pneg %p107
      $region42: #{tpu_custom_call.1} parent=39 // pred_check_branch
        %689 = sbr.rel (%p687) target = $region44
      $region43: #{tpu_custom_call.1} parent=39 // pred_region
        %p690 = scmp.lt.s32.totalorder %s16, 1
        %s691 = scalar_select %p690, %s16, 1
        %s692 = smul.addr %s691, 8
        %s693 = smul.addr %s692, 4
        %s694 = scalar_lea.vmem %s3, %s693
      $region44: #{tpu_custom_call.1} parent=39 // pred_fallthru
        _
    $region40: #{tpu_custom_call.1} parent=5 // pred_fallthru
      _
  $region6: #{tpu_custom_call.1} parent=0 // loop_footer
    %s14 = sadd.s32 1, %s10
  $region7: #{tpu_custom_call.1} parent=0 // loop_footer_branch
    %9 = sbr.rel target = $region3
  $region8: #{tpu_custom_call.1} parent=0 // loop_exit
    _

</llo_original>
